<compile_context>
chip_gen: v7x
topology: tpu7x:2x2x1
jax: 0.10.0
libtpu: 0.0.40
codegen_flags: <defaults>
</compile_context>

<pallas_src>
import functools

import jax
import jax.numpy as jnp
from jax import lax
from jax.experimental import pallas as pl
from jax.experimental.pallas import tpu as pltpu

_NEG = -1e30  # "minus infinity" for padded vocab columns (exp -> 0, no NaNs)


def _round_up(a, b):
    return (a + b - 1) // b * b


def _choose_bblk(B, Tp, target_rows):
    """Pack ~target_rows rows (Bblk batches x Tp rows) into one MXU M tile."""
    bblk = max(1, min(B, pl.cdiv(target_rows, Tp)))
    # Prefer >= 2 row tiles (megacore / v7x two TensorCores) when tiles can
    # stay >= 128 rows; otherwise keep the bigger tile (weight re-streaming
    # dominates).
    if pl.cdiv(B, bblk) < 2:
        half = pl.cdiv(bblk, 2)
        if pl.cdiv(B, half) >= 2 and half * Tp >= 128:
            bblk = half
    return bblk


def _vmem_limit(block_bytes, interm_bytes=0):
    # double-buffered blocks + in-kernel intermediates + headroom, capped so
    # it stays well inside v7x's 64 MiB per-TC VMEM.
    est = 2 * int(block_bytes) + int(interm_bytes)
    est = est + est // 2 + (4 << 20)
    return max(16 << 20, min(40 << 20, est))


# ----------------------------------------------------------------------------
# Kernels
# ----------------------------------------------------------------------------
def _pointer_gen_kernel(x_ref, attn_ref, ids_ref, w_ref, b_ref, wpg_ref,
                        bpg_ref, out_ref, m_ref, l_ref, alpha_ref, attn_s_ref,
                        *, inv_temp, bblk, tp):
    # grid = (row_tiles, 2 passes, vocab_tiles)
    p_ax = pl.program_id(1)
    v_ax = pl.program_id(2)
    tv = w_ref.shape[1]
    sp = ids_ref.shape[1]
    tr = bblk * tp

    xr = x_ref[...]                                            # (TR, D) bf16

    @pl.when((p_ax == 0) & (v_ax == 0))
    def _init():
        m_ref[...] = jnp.full_like(m_ref, _NEG)
        l_ref[...] = jnp.zeros_like(l_ref)
        # p_gen on the MXU: w_pgen lives in column 0 of a (D, 128) tile.
        pg = jnp.dot(xr, wpg_ref[...], preferred_element_type=jnp.float32)
        alpha_ref[...] = jax.nn.sigmoid((pg + bpg_ref[...])[:, 0:1])

    # Logits for this vocab tile; 1/temp applied in-kernel (one VPU mul) so
    # the padded bf16 weights are temperature-independent.  Padded columns
    # have weight 0 and bias -1e30 so they vanish in the softmax.
    logit = (jnp.dot(xr, w_ref[...], preferred_element_type=jnp.float32)
             + b_ref[...]) * inv_temp                           # (TR, tv) f32

    @pl.when(p_ax == 0)
    def _pass0():
        # streaming max / sum-exp over vocab tiles
        m_prev = m_ref[...]
        m_new = jnp.maximum(m_prev, jnp.max(logit, axis=-1, keepdims=True))
        l_ref[...] = (l_ref[...] * jnp.exp(m_prev - m_new)
                      + jnp.sum(jnp.exp(logit - m_new), axis=-1, keepdims=True))
        m_ref[...] = m_new

    @pl.when((p_ax == 1) & (v_ax == 0))
    def _prescale_attn():
        # (1 - alpha)/temp folded into attn ONCE per row tile, stored as the
        # bf16 MXU operand used by every vocab tile of pass 1.
        scale = ((1.0 - alpha_ref[...]) * inv_temp).reshape(bblk, tp, 1)
        attn_s_ref[...] = (attn_ref[...] * scale).astype(attn_s_ref.dtype)

    @pl.when(p_ax == 1)
    def _pass1():
        alpha = alpha_ref[...]                                 # (TR, 1)
        inv_l = pl.reciprocal(l_ref[...], approx=True)         # (TR, 1), EUP
        vocab = jnp.exp(logit - m_ref[...]) * (alpha * inv_l)  # (TR, tv)

        # scatter_add(dim=2) == per-batch (attn_scaled @ one_hot(ids)).
        # One-hot is exact in bf16; Sp is only padded to a multiple of 8.
        col0 = v_ax * tv
        lane_ids = col0 + lax.broadcasted_iota(jnp.int32, (bblk, sp, tv), 2)
        oh = (ids_ref[...] == lane_ids).astype(jnp.bfloat16)   # (Bblk, Sp, tv)

        sc = lax.dot_general(                                  # (Bblk, Tp, tv)
            attn_s_ref[...], oh,
            dimension_numbers=(((2,), (1,)), ((0,), (0,))),
            preferred_element_type=jnp.float32)

        # single log + single full-tile (lane-dense, unmasked) store
        out_ref[...] = jnp.log(vocab + sc.reshape(tr, tv) + 1e-18)


def _log_softmax_kernel(x_ref, w_ref, b_ref, out_ref, m_ref, l_ref):
    # pointer_gen = False path: two-pass log_softmax(proj(x)) over vocab tiles.
    p_ax = pl.program_id(1)

    @pl.when((p_ax == 0) & (pl.program_id(2) == 0))
    def _init():
        m_ref[...] = jnp.full_like(m_ref, _NEG)
        l_ref[...] = jnp.zeros_like(l_ref)

    logit = jnp.dot(x_ref[...], w_ref[...],
                    preferred_element_type=jnp.float32) + b_ref[...]

    @pl.when(p_ax == 0)
    def _pass0():
        m_prev = m_ref[...]
        m_new = jnp.maximum(m_prev, jnp.max(logit, axis=-1, keepdims=True))
        l_ref[...] = (l_ref[...] * jnp.exp(m_prev - m_new)
                      + jnp.sum(jnp.exp(logit - m_new), axis=-1, keepdims=True))
        m_ref[...] = m_new

    @pl.when(p_ax == 1)
    def _pass1():
        out_ref[...] = logit - (m_ref[...] + jnp.log(l_ref[...]))


# ----------------------------------------------------------------------------
# Parameter preparation (hoisted out of the per-call wrappers; reuse across
# calls / temperatures)
# ----------------------------------------------------------------------------
def make_pointer_gen_params(w_proj, b_proj, w_pgen, b_pgen, *, n_extra,
                            tv=2048):
    D, V = w_proj.shape
    V_ext = V + n_extra
    tv = _round_up(min(int(tv), _round_up(V_ext, 128)), 128)
    Vp = _round_up(V_ext, tv)
    w_pad = (jnp.zeros((D, Vp), jnp.float32)
             .at[:, :V].set(w_proj.astype(jnp.float32))).astype(jnp.bfloat16)
    b_pad = (jnp.full((1, Vp), _NEG, jnp.float32)
             .at[:, :V].set(b_proj.astype(jnp.float32).reshape(1, V)))
    wpg_pad = (jnp.zeros((D, 128), jnp.float32)
               .at[:, 0].set(w_pgen.astype(jnp.float32).reshape(D))
               ).astype(jnp.bfloat16)
    bpg_pad = jnp.tile(b_pgen.astype(jnp.float32).reshape(1, 1), (1, 128))
    return dict(w=w_pad, b=b_pad, wpg=wpg_pad, bpg=bpg_pad,
                D=D, V=V, V_ext=V_ext, Vp=Vp, tv=tv)


def make_proj_params(w_proj, b_proj, *, tv=2048):
    D, V = w_proj.shape
    tv = _round_up(min(int(tv), _round_up(V, 128)), 128)
    Vp = _round_up(V, tv)
    w_pad = (jnp.zeros((D, Vp), jnp.float32)
             .at[:, :V].set(w_proj.astype(jnp.float32))).astype(jnp.bfloat16)
    b_pad = (jnp.full((1, Vp), _NEG, jnp.float32)
             .at[:, :V].set(b_proj.astype(jnp.float32).reshape(1, V)))
    return dict(w=w_pad, b=b_pad, D=D, V=V, Vp=Vp, tv=tv)


# ----------------------------------------------------------------------------
# Wrappers
# ----------------------------------------------------------------------------
def generator_pointer_gen(x, attn_dist, enc_ids, params, *, temp=1.0,
                          target_rows=256):
    B, T, D = x.shape
    S = attn_dist.shape[2]
    V_ext, Vp, tv = params["V_ext"], params["Vp"], params["tv"]
    inv_temp = 1.0 / float(temp)

    # ---- tiling / padding choices ------------------------------------------
    Tp = _round_up(T, 8)                       # sublane-aligned rows per batch
    Bblk = _choose_bblk(B, Tp, target_rows)    # pack ~target_rows MXU rows
    Bp = _round_up(B, Bblk)
    TR = Bblk * Tp
    Rp = Bp * Tp
    Sp = _round_up(S, 8)                       # sublane-aligned source length
    nrb, nv = Bp // Bblk, Vp // tv

    # ---- host-side packing of activations (weights already prepared) --------
    x_p = (jnp.zeros((Bp, Tp, D), jnp.bfloat16)
           .at[:B, :T, :].set(x.astype(jnp.bfloat16))).reshape(Rp, D)
    attn_p = (jnp.zeros((Bp, Tp, Sp), jnp.float32)
              .at[:B, :T, :S].set(attn_dist.astype(jnp.float32)))
    ids_p = (jnp.full((Bp, Sp), -1, jnp.int32)             # -1 never matches
             .at[:B, :S].set(enc_ids.astype(jnp.int32))).reshape(Bp, Sp, 1)

    kernel = functools.partial(_pointer_gen_kernel, inv_temp=inv_temp,
                               bblk=Bblk, tp=Tp)

    block_bytes = (TR * D * 2 + Bblk * Tp * Sp * 4 + Bblk * Sp * 4
                   + D * tv * 2 + tv * 4 + D * 128 * 2 + 128 * 4
                   + TR * tv * 4)
    interm_bytes = (2 * TR * tv * 4                 # logit + vocab
                    + Bblk * Sp * tv * (4 + 2)      # iota + one-hot
                    + Bblk * Tp * tv * 4            # scatter result
                    + Bblk * Tp * Sp * 2            # pre-scaled attn scratch
                    + 4 * TR * 4)                   # m / l / alpha scratch
    vmem_limit = _vmem_limit(block_bytes, interm_bytes)

    out = pl.pallas_call(
        kernel,
        out_shape=jax.ShapeDtypeStruct((Rp, Vp), jnp.float32),
        grid_spec=pltpu.PrefetchScalarGridSpec(
            num_scalar_prefetch=0,
            grid=(nrb, 2, nv),
            in_specs=[
                pl.BlockSpec((TR, D), lambda r, p, v: (r, 0)),           # x
                pl.BlockSpec((Bblk, Tp, Sp), lambda r, p, v: (r, 0, 0)),  # attn
                pl.BlockSpec((Bblk, Sp, 1), lambda r, p, v: (r, 0, 0)),   # ids
                pl.BlockSpec((D, tv), lambda r, p, v: (0, v)),           # w_proj
                pl.BlockSpec((1, tv), lambda r, p, v: (0, v)),           # b_proj
                pl.BlockSpec((D, 128), lambda r, p, v: (0, 0)),          # w_pgen
                pl.BlockSpec((1, 128), lambda r, p, v: (0, 0)),          # b_pgen
            ],
            # pass 0 parks on block (r, 0) (never written, never flushed);
            # pass 1 walks the vocab tiles and writes each block exactly once.
            out_specs=pl.BlockSpec((TR, tv), lambda r, p, v: (r, v * p)),
            scratch_shapes=[
                pltpu.VMEM((TR, 1), jnp.float32),            # running max
                pltpu.VMEM((TR, 1), jnp.float32),            # running sum-exp
                pltpu.VMEM((TR, 1), jnp.float32),            # alpha
                pltpu.VMEM((Bblk, Tp, Sp), jnp.bfloat16),    # pre-scaled attn
            ],
        ),
        compiler_params=pltpu.CompilerParams(
            dimension_semantics=("parallel", "arbitrary", "arbitrary"),
            vmem_limit_bytes=vmem_limit),
    )(x_p, attn_p, ids_p, params["w"], params["b"], params["wpg"],
      params["bpg"])

    return out.reshape(Bp, Tp, Vp)[:B, :T, :V_ext]


def generator_no_pointer(x, params, *, target_rows=256):
    B, T, D = x.shape
    V, Vp, tv = params["V"], params["Vp"], params["tv"]

    Tp = _round_up(T, 8)
    Bblk = _choose_bblk(B, Tp, target_rows)
    Bp = _round_up(B, Bblk)
    TR = Bblk * Tp
    Rp = Bp * Tp
    nrb, nv = Bp // Bblk, Vp // tv

    x_p = (jnp.zeros((Bp, Tp, D), jnp.bfloat16)
           .at[:B, :T, :].set(x.astype(jnp.bfloat16))).reshape(Rp, D)

    block_bytes = TR * D * 2 + D * tv * 2 + tv * 4 + TR * tv * 4
    vmem_limit = _vmem_limit(block_bytes, 2 * TR * tv * 4)

    out = pl.pallas_call(
        _log_softmax_kernel,
        out_shape=jax.ShapeDtypeStruct((Rp, Vp), jnp.float32),
        grid_spec=pltpu.PrefetchScalarGridSpec(
            num_scalar_prefetch=0,
            grid=(nrb, 2, nv),
            in_specs=[
                pl.BlockSpec((TR, D), lambda r, p, v: (r, 0)),
                pl.BlockSpec((D, tv), lambda r, p, v: (0, v)),
                pl.BlockSpec((1, tv), lambda r, p, v: (0, v)),
            ],
            out_specs=pl.BlockSpec((TR, tv), lambda r, p, v: (r, v * p)),
            scratch_shapes=[pltpu.VMEM((TR, 1), jnp.float32),
                            pltpu.VMEM((TR, 1), jnp.float32)],
        ),
        compiler_params=pltpu.CompilerParams(
            dimension_semantics=("parallel", "arbitrary", "arbitrary"),
            vmem_limit_bytes=vmem_limit),
    )(x_p, params["w"], params["b"])

    return out.reshape(Bp, Tp, Vp)[:B, :T, :V]


# ----------------------------------------------------------------------------
# Pure-JAX references (f32, for verification)
# ----------------------------------------------------------------------------
def ref_pointer_gen(x, attn_dist, enc_ids, w_proj, b_proj, w_pgen, b_pgen,
                    *, n_extra, temp=1.0):
    V = w_proj.shape[1]
    V_ext = V + n_extra
    p_gen = jnp.einsum('btd,d->bt', x, w_pgen.reshape(-1))[..., None] \
        + b_pgen.reshape(())
    alpha = jax.nn.sigmoid(p_gen)
    logit = jnp.einsum('btd,dv->btv', x, w_proj) + b_proj.reshape(-1)
    vocab_dist = jax.nn.softmax(logit / temp, axis=2)
    vocab_dist_ = alpha * vocab_dist
    attn_ = (1.0 - alpha) * (attn_dist / temp)
    vocab_pad = jnp.pad(vocab_dist_, ((0, 0), (0, 0), (0, n_extra)))
    onehot = jax.nn.one_hot(enc_ids, V_ext, dtype=jnp.float32)  # (B, S, V_ext)
    scattered = jnp.einsum('bts,bsv->btv', attn_, onehot)
    return jnp.log(vocab_pad + scattered + 1e-18)


def ref_no_pointer(x, w_proj, b_proj):
    logit = jnp.einsum('btd,dv->btv', x, w_proj) + b_proj.reshape(-1)
    return jax.nn.log_softmax(logit, axis=-1)


# ----------------------------------------------------------------------------
def _run_checks(key, *, B, T, D, S, V, n_extra, tv, target_rows, temps):
    k = jax.random.split(key, 7)
    V_ext = V + n_extra

    x = jax.random.normal(k[0], (B, T, D), dtype=jnp.float32)
    attn = jax.nn.softmax(
        jax.random.normal(k[1], (B, T, S), dtype=jnp.float32), axis=-1)
    enc_ids = jax.random.randint(k[2], (B, S), 0, V_ext, dtype=jnp.int32)
    w_proj = 0.1 * jax.random.normal(k[3], (D, V), dtype=jnp.float32)
    b_proj = 0.1 * jax.random.normal(k[4], (1, V), dtype=jnp.float32)
    w_pgen = 0.1 * jax.random.normal(k[5], (1, D), dtype=jnp.float32)
    b_pgen = 0.1 * jax.random.normal(k[6], (1, 1), dtype=jnp.float32)

    # Weight padding / casting prepared once and reused across temperatures.
    pg_params = make_pointer_gen_params(w_proj, b_proj, w_pgen, b_pgen,
                                        n_extra=n_extra, tv=tv)
    for temp in temps:
        out = generator_pointer_gen(x, attn, enc_ids, pg_params, temp=temp,
                                    target_rows=target_rows)
        out = jax.block_until_ready(out)
        ref = ref_pointer_gen(x, attn, enc_ids, w_proj, b_proj, w_pgen,
                              b_pgen, n_extra=n_extra, temp=temp)
        assert out.shape == (B, T, V_ext)
        err = float(jnp.max(jnp.abs(out - ref)))
        assert jnp.allclose(out, ref, atol=5e-2, rtol=5e-2), (
            f"pointer_gen mismatch (B={B},T={T},V={V},temp={temp}) "
            f"max_abs_err={err}")

    np_params = make_proj_params(w_proj, b_proj, tv=tv)
    out2 = jax.block_until_ready(
        generator_no_pointer(x, np_params, target_rows=target_rows))
    ref2 = ref_no_pointer(x, w_proj, b_proj)
    assert out2.shape == (B, T, V)
    err2 = float(jnp.max(jnp.abs(out2 - ref2)))
    assert jnp.allclose(out2, ref2, atol=5e-2, rtol=5e-2), (
        f"log_softmax mismatch (B={B},T={T},V={V}) max_abs_err={err2}")


if __name__ == "__main__":
    key = jax.random.PRNGKey(0)
    k_a, k_b = jax.random.split(key)

    # Config A: original small shapes (single vocab tile, single row tile).
    _run_checks(k_a, B=2, T=8, D=32, S=16, V=128, n_extra=16,
                tv=2048, target_rows=256, temps=(1.0, 2.0))

    # Config B: exercises the streaming softmax across multiple vocab tiles,
    # the parked output BlockSpec, multiple row tiles with scratch re-init,
    # batch padding (Bp > B) and non-multiple-of-8 source length.
    _run_checks(k_b, B=5, T=8, D=64, S=20, V=300, n_extra=30,
                tv=128, target_rows=16, temps=(1.0, 2.0))

    print("KERNEL_OK")
</pallas_src>

<mosaic_0001>
module attributes {stable_mosaic.version = 11 : i64} {
  func.func @_pointer_gen_kernel(%arg0: i32, %arg1: i32, %arg2: i32, %arg3: memref<16x32xbf16, #tpu.memory_space<vmem>>, %arg4: memref<2x8x16xf32, #tpu.memory_space<vmem>>, %arg5: memref<2x16x1xi32, #tpu.memory_space<vmem>>, %arg6: memref<32x256xbf16, #tpu.memory_space<vmem>>, %arg7: memref<1x256xf32, #tpu.memory_space<vmem>>, %arg8: memref<32x128xbf16, #tpu.memory_space<vmem>>, %arg9: memref<1x128xf32, #tpu.memory_space<vmem>>, %arg10: memref<16x256xf32, #tpu.memory_space<vmem>>, %arg11: memref<16x1xf32, #tpu.memory_space<vmem>>, %arg12: memref<16x1xf32, #tpu.memory_space<vmem>>, %arg13: memref<16x1xf32, #tpu.memory_space<vmem>>, %arg14: memref<2x8x16xbf16, #tpu.memory_space<vmem>>) attributes {dimension_semantics = [#tpu.dimension_semantics<parallel>, #tpu.dimension_semantics<arbitrary>, #tpu.dimension_semantics<arbitrary>], iteration_bounds = array<i64: 1, 2, 1>, scalar_prefetch = 0 : i64, scratch_operands = 4 : i64, tpu.core_type = #tpu.core_type<tc>, window_params = [{transform_indices = @transform_0, window_bounds = array<i64: 16, 32>}, {transform_indices = @transform_1, window_bounds = array<i64: 2, 8, 16>}, {transform_indices = @transform_2, window_bounds = array<i64: 2, 16, 1>}, {transform_indices = @transform_3, window_bounds = array<i64: 32, 256>}, {transform_indices = @transform_4, window_bounds = array<i64: 1, 256>}, {pipeline_mode = #tpu.pipeline_mode<synchronous>, transform_indices = @transform_5, window_bounds = array<i64: 32, 128>}, {pipeline_mode = #tpu.pipeline_mode<synchronous>, transform_indices = @transform_6, window_bounds = array<i64: 1, 128>}, {transform_indices = @transform_7, window_bounds = array<i64: 16, 256>}]} {
    %c0 = arith.constant 0 : index
    %c0_0 = arith.constant 0 : index
    %0 = vector.load %arg3[%c0, %c0_0] : memref<16x32xbf16, #tpu.memory_space<vmem>>, vector<16x32xbf16>
    %c0_i32 = arith.constant 0 : i32
    %1 = arith.cmpi eq, %arg1, %c0_i32 : i32
    %c0_i32_1 = arith.constant 0 : i32
    %2 = arith.cmpi eq, %arg2, %c0_i32_1 : i32
    %3 = arith.andi %1, %2 : i1
    %4 = arith.extui %3 : i1 to i32
    %c0_i32_2 = arith.constant 0 : i32
    %5 = arith.cmpi ne, %4, %c0_i32_2 : i32
    scf.if %5 {
      %cst_14 = arith.constant -1.000000e+30 : f32
      %24 = vector.broadcast %cst_14 : f32 to vector<16x1xf32>
      %c0_15 = arith.constant 0 : index
      %c0_16 = arith.constant 0 : index
      %25 = vector.load %arg11[%c0_15, %c0_16] : memref<16x1xf32, #tpu.memory_space<vmem>>, vector<16x1xf32>
      tpu.vector_store %arg11[%c0_15, %c0_16], %24 {strides = array<i32>} : memref<16x1xf32, #tpu.memory_space<vmem>>, vector<16x1xf32>,
      %cst_17 = arith.constant 0.000000e+00 : f32
      %26 = vector.broadcast %cst_17 : f32 to vector<16x1xf32>
      %c0_18 = arith.constant 0 : index
      %c0_19 = arith.constant 0 : index
      %27 = vector.load %arg12[%c0_18, %c0_19] : memref<16x1xf32, #tpu.memory_space<vmem>>, vector<16x1xf32>
      tpu.vector_store %arg12[%c0_18, %c0_19], %26 {strides = array<i32>} : memref<16x1xf32, #tpu.memory_space<vmem>>, vector<16x1xf32>,
      %c0_20 = arith.constant 0 : index
      %c0_21 = arith.constant 0 : index
      %28 = vector.load %arg8[%c0_20, %c0_21] : memref<32x128xbf16, #tpu.memory_space<vmem>>, vector<32x128xbf16>
      %cst_22 = arith.constant dense<0.000000e+00> : vector<16x128xf32>
      %29 = tpu.matmul %0, %28, %cst_22 {dimension_numbers = #tpu.dot_dimension_numbers<[1], [0], [0], [1], [0, 0, 1, 1], [], []>} : vector<16x32xbf16>, vector<32x128xbf16>, vector<16x128xf32> -> vector<16x128xf32>
      %c0_23 = arith.constant 0 : index
      %c0_24 = arith.constant 0 : index
      %30 = vector.load %arg9[%c0_23, %c0_24] : memref<1x128xf32, #tpu.memory_space<vmem>>, vector<1x128xf32>
      %31 = vector.broadcast %30 : vector<1x128xf32> to vector<16x128xf32>
      %32 = arith.addf %29, %31 : vector<16x128xf32>
      %33 = vector.extract_strided_slice %32 {offsets = [0, 0], sizes = [16, 1], strides = [1, 1]} : vector<16x128xf32> to vector<16x1xf32>
      %34 = arith.negf %33 : vector<16x1xf32>
      %35 = math.exp %34 : vector<16x1xf32>
      %cst_25 = arith.constant 1.000000e+00 : f32
      %36 = vector.broadcast %cst_25 : f32 to vector<16x1xf32>
      %37 = arith.addf %36, %35 : vector<16x1xf32>
      %38 = arith.divf %36, %37 : vector<16x1xf32>
      %c0_26 = arith.constant 0 : index
      %c0_27 = arith.constant 0 : index
      %39 = vector.load %arg13[%c0_26, %c0_27] : memref<16x1xf32, #tpu.memory_space<vmem>>, vector<16x1xf32>
      tpu.vector_store %arg13[%c0_26, %c0_27], %38 {strides = array<i32>} : memref<16x1xf32, #tpu.memory_space<vmem>>, vector<16x1xf32>,
    } else {
    }
    %c0_3 = arith.constant 0 : index
    %c0_4 = arith.constant 0 : index
    %6 = vector.load %arg6[%c0_3, %c0_4] : memref<32x256xbf16, #tpu.memory_space<vmem>>, vector<32x256xbf16>
    %cst = arith.constant dense<0.000000e+00> : vector<16x256xf32>
    %7 = tpu.matmul %0, %6, %cst {dimension_numbers = #tpu.dot_dimension_numbers<[1], [0], [0], [1], [0, 0, 1, 1], [], []>} : vector<16x32xbf16>, vector<32x256xbf16>, vector<16x256xf32> -> vector<16x256xf32>
    %c0_5 = arith.constant 0 : index
    %c0_6 = arith.constant 0 : index
    %8 = vector.load %arg7[%c0_5, %c0_6] : memref<1x256xf32, #tpu.memory_space<vmem>>, vector<1x256xf32>
    %9 = vector.broadcast %8 : vector<1x256xf32> to vector<16x256xf32>
    %10 = arith.addf %7, %9 : vector<16x256xf32>
    %cst_7 = arith.constant 1.000000e+00 : f32
    %11 = vector.broadcast %cst_7 : f32 to vector<16x256xf32>
    %12 = arith.mulf %10, %11 : vector<16x256xf32>
    %c0_i32_8 = arith.constant 0 : i32
    %13 = arith.cmpi eq, %arg1, %c0_i32_8 : i32
    %14 = arith.extui %13 : i1 to i32
    %c0_i32_9 = arith.constant 0 : i32
    %15 = arith.cmpi ne, %14, %c0_i32_9 : i32
    scf.if %15 {
      %c0_14 = arith.constant 0 : index
      %c0_15 = arith.constant 0 : index
      %24 = vector.load %arg11[%c0_14, %c0_15] : memref<16x1xf32, #tpu.memory_space<vmem>>, vector<16x1xf32>
      %cst_16 = arith.constant dense<0xFF800000> : vector<16xf32>
      %25 = vector.multi_reduction <maximumf>, %12, %cst_16 [1] : vector<16x256xf32> to vector<16xf32>
      %26 = vector.shape_cast %25 : vector<16xf32> to vector<16x1xf32>
      %27 = arith.maximumf %24, %26 : vector<16x1xf32>
      %c0_17 = arith.constant 0 : index
      %c0_18 = arith.constant 0 : index
      %28 = vector.load %arg12[%c0_17, %c0_18] : memref<16x1xf32, #tpu.memory_space<vmem>>, vector<16x1xf32>
      %29 = arith.subf %24, %27 : vector<16x1xf32>
      %30 = math.exp %29 : vector<16x1xf32>
      %31 = arith.mulf %28, %30 : vector<16x1xf32>
      %32 = vector.broadcast %27 : vector<16x1xf32> to vector<16x256xf32>
      %33 = arith.subf %12, %32 : vector<16x256xf32>
      %34 = math.exp %33 : vector<16x256xf32>
      %cst_19 = arith.constant dense<0.000000e+00> : vector<16xf32>
      %35 = vector.multi_reduction <add>, %34, %cst_19 [1] : vector<16x256xf32> to vector<16xf32>
      %36 = vector.shape_cast %35 : vector<16xf32> to vector<16x1xf32>
      %37 = arith.addf %31, %36 : vector<16x1xf32>
      %c0_20 = arith.constant 0 : index
      %c0_21 = arith.constant 0 : index
      %38 = vector.load %arg12[%c0_20, %c0_21] : memref<16x1xf32, #tpu.memory_space<vmem>>, vector<16x1xf32>
      tpu.vector_store %arg12[%c0_20, %c0_21], %37 {strides = array<i32>} : memref<16x1xf32, #tpu.memory_space<vmem>>, vector<16x1xf32>,
      %c0_22 = arith.constant 0 : index
      %c0_23 = arith.constant 0 : index
      %39 = vector.load %arg11[%c0_22, %c0_23] : memref<16x1xf32, #tpu.memory_space<vmem>>, vector<16x1xf32>
      tpu.vector_store %arg11[%c0_22, %c0_23], %27 {strides = array<i32>} : memref<16x1xf32, #tpu.memory_space<vmem>>, vector<16x1xf32>,
    } else {
    }
    %c1_i32 = arith.constant 1 : i32
    %16 = arith.cmpi eq, %arg1, %c1_i32 : i32
    %c0_i32_10 = arith.constant 0 : i32
    %17 = arith.cmpi eq, %arg2, %c0_i32_10 : i32
    %18 = arith.andi %16, %17 : i1
    %19 = arith.extui %18 : i1 to i32
    %c0_i32_11 = arith.constant 0 : i32
    %20 = arith.cmpi ne, %19, %c0_i32_11 : i32
    scf.if %20 {
      %c0_14 = arith.constant 0 : index
      %c0_15 = arith.constant 0 : index
      %24 = vector.load %arg13[%c0_14, %c0_15] : memref<16x1xf32, #tpu.memory_space<vmem>>, vector<16x1xf32>
      %cst_16 = arith.constant 1.000000e+00 : f32
      %25 = vector.broadcast %cst_16 : f32 to vector<16x1xf32>
      %26 = arith.subf %25, %24 : vector<16x1xf32>
      %cst_17 = arith.constant 1.000000e+00 : f32
      %27 = vector.broadcast %cst_17 : f32 to vector<16x1xf32>
      %28 = arith.mulf %26, %27 : vector<16x1xf32>
      %29 = vector.shape_cast %28 : vector<16x1xf32> to vector<2x8x1xf32>
      %c0_18 = arith.constant 0 : index
      %c0_19 = arith.constant 0 : index
      %c0_20 = arith.constant 0 : index
      %30 = vector.load %arg4[%c0_18, %c0_19, %c0_20] : memref<2x8x16xf32, #tpu.memory_space<vmem>>, vector<2x8x16xf32>
      %31 = vector.broadcast %29 : vector<2x8x1xf32> to vector<2x8x16xf32>
      %32 = arith.mulf %30, %31 : vector<2x8x16xf32>
      %33 = arith.truncf %32 : vector<2x8x16xf32> to vector<2x8x16xbf16>
      %c0_21 = arith.constant 0 : index
      %c0_22 = arith.constant 0 : index
      %c0_23 = arith.constant 0 : index
      %34 = vector.load %arg14[%c0_21, %c0_22, %c0_23] : memref<2x8x16xbf16, #tpu.memory_space<vmem>>, vector<2x8x16xbf16>
      tpu.vector_store %arg14[%c0_21, %c0_22, %c0_23], %33 {strides = array<i32>} : memref<2x8x16xbf16, #tpu.memory_space<vmem>>, vector<2x8x16xbf16>,
    } else {
    }
    %c1_i32_12 = arith.constant 1 : i32
    %21 = arith.cmpi eq, %arg1, %c1_i32_12 : i32
    %22 = arith.extui %21 : i1 to i32
    %c0_i32_13 = arith.constant 0 : i32
    %23 = arith.cmpi ne, %22, %c0_i32_13 : i32
    scf.if %23 {
      %c0_14 = arith.constant 0 : index
      %c0_15 = arith.constant 0 : index
      %24 = vector.load %arg13[%c0_14, %c0_15] : memref<16x1xf32, #tpu.memory_space<vmem>>, vector<16x1xf32>
      %c0_16 = arith.constant 0 : index
      %c0_17 = arith.constant 0 : index
      %25 = vector.load %arg12[%c0_16, %c0_17] : memref<16x1xf32, #tpu.memory_space<vmem>>, vector<16x1xf32>
      %26 = tpu.reciprocal %25 {approx = true} : vector<16x1xf32> -> vector<16x1xf32>
      %c0_18 = arith.constant 0 : index
      %c0_19 = arith.constant 0 : index
      %27 = vector.load %arg11[%c0_18, %c0_19] : memref<16x1xf32, #tpu.memory_space<vmem>>, vector<16x1xf32>
      %28 = vector.broadcast %27 : vector<16x1xf32> to vector<16x256xf32>
      %29 = arith.subf %12, %28 : vector<16x256xf32>
      %30 = math.exp %29 : vector<16x256xf32>
      %31 = arith.mulf %24, %26 : vector<16x1xf32>
      %32 = vector.broadcast %31 : vector<16x1xf32> to vector<16x256xf32>
      %33 = arith.mulf %30, %32 : vector<16x256xf32>
      %c256_i32 = arith.constant 256 : i32
      %34 = arith.muli %arg2, %c256_i32 : i32
      %35 = tpu.iota {dimensions = array<i32: 2>} : vector<2x16x256xi32>
      %36 = vector.broadcast %34 : i32 to vector<2x16x256xi32>
      %37 = arith.addi %36, %35 : vector<2x16x256xi32>
      %c0_20 = arith.constant 0 : index
      %c0_21 = arith.constant 0 : index
      %c0_22 = arith.constant 0 : index
      %38 = vector.load %arg5[%c0_20, %c0_21, %c0_22] : memref<2x16x1xi32, #tpu.memory_space<vmem>>, vector<2x16x1xi32>
      %39 = vector.broadcast %38 : vector<2x16x1xi32> to vector<2x16x256xi32>
      %40 = arith.cmpi eq, %39, %37 : vector<2x16x256xi32>
      %41 = arith.extui %40 : vector<2x16x256xi1> to vector<2x16x256xi32>
      %42 = arith.sitofp %41 : vector<2x16x256xi32> to vector<2x16x256xf32>
      %43 = arith.truncf %42 : vector<2x16x256xf32> to vector<2x16x256xbf16>
      %c0_23 = arith.constant 0 : index
      %c0_24 = arith.constant 0 : index
      %c0_25 = arith.constant 0 : index
      %44 = vector.load %arg14[%c0_23, %c0_24, %c0_25] : memref<2x8x16xbf16, #tpu.memory_space<vmem>>, vector<2x8x16xbf16>
      %cst_26 = arith.constant dense<0.000000e+00> : vector<2x8x256xf32>
      %45 = tpu.matmul %44, %43, %cst_26 {dimension_numbers = #tpu.dot_dimension_numbers<[2], [1], [1], [2], [0, 0, 0, 1, 1, 2], [0], [0]>} : vector<2x8x16xbf16>, vector<2x16x256xbf16>, vector<2x8x256xf32> -> vector<2x8x256xf32>
      %46 = vector.shape_cast %45 : vector<2x8x256xf32> to vector<16x256xf32>
      %47 = arith.addf %33, %46 : vector<16x256xf32>
      %cst_27 = arith.constant 1.000000e-18 : f32
      %48 = vector.broadcast %cst_27 : f32 to vector<16x256xf32>
      %49 = arith.addf %47, %48 : vector<16x256xf32>
      %50 = math.log %49 : vector<16x256xf32>
      %c0_28 = arith.constant 0 : index
      %c0_29 = arith.constant 0 : index
      %51 = vector.load %arg10[%c0_28, %c0_29] : memref<16x256xf32, #tpu.memory_space<vmem>>, vector<16x256xf32>
      tpu.vector_store %arg10[%c0_28, %c0_29], %50 {strides = array<i32>} : memref<16x256xf32, #tpu.memory_space<vmem>>, vector<16x256xf32>,
    } else {
    }
    return
  }
  func.func @transform_0(%arg0: i32, %arg1: i32, %arg2: i32) -> (i32, i32) {
    %c0_i32 = arith.constant 0 : i32
    %c0_i32_0 = arith.constant 0 : i32
    return %arg0, %c0_i32 : i32, i32
  }
  func.func @transform_1(%arg0: i32, %arg1: i32, %arg2: i32) -> (i32, i32, i32) {
    %c0_i32 = arith.constant 0 : i32
    %c0_i32_0 = arith.constant 0 : i32
    %c0_i32_1 = arith.constant 0 : i32
    return %arg0, %c0_i32, %c0_i32_0 : i32, i32, i32
  }
  func.func @transform_2(%arg0: i32, %arg1: i32, %arg2: i32) -> (i32, i32, i32) {
    %c0_i32 = arith.constant 0 : i32
    %c0_i32_0 = arith.constant 0 : i32
    %c0_i32_1 = arith.constant 0 : i32
    return %arg0, %c0_i32, %c0_i32_0 : i32, i32, i32
  }
  func.func @transform_3(%arg0: i32, %arg1: i32, %arg2: i32) -> (i32, i32) {
    %c0_i32 = arith.constant 0 : i32
    %c0_i32_0 = arith.constant 0 : i32
    return %c0_i32, %arg2 : i32, i32
  }
  func.func @transform_4(%arg0: i32, %arg1: i32, %arg2: i32) -> (i32, i32) {
    %c0_i32 = arith.constant 0 : i32
    %c0_i32_0 = arith.constant 0 : i32
    return %c0_i32, %arg2 : i32, i32
  }
  func.func @transform_5(%arg0: i32, %arg1: i32, %arg2: i32) -> (i32, i32) {
    %c0_i32 = arith.constant 0 : i32
    %c0_i32_0 = arith.constant 0 : i32
    %c0_i32_1 = arith.constant 0 : i32
    return %c0_i32, %c0_i32_0 : i32, i32
  }
  func.func @transform_6(%arg0: i32, %arg1: i32, %arg2: i32) -> (i32, i32) {
    %c0_i32 = arith.constant 0 : i32
    %c0_i32_0 = arith.constant 0 : i32
    %c0_i32_1 = arith.constant 0 : i32
    return %c0_i32, %c0_i32_0 : i32, i32
  }
  func.func @transform_7(%arg0: i32, %arg1: i32, %arg2: i32) -> (i32, i32) {
    %0 = arith.muli %arg2, %arg1 : i32
    %c0_i32 = arith.constant 0 : i32
    return %arg0, %0 : i32, i32
  }
}

</mosaic_0001>

<llo_original>
// kernel: tpu_custom_call.1
$region0: #{tpu_custom_call.1}
  #allocation0 [shape = 'u32[]', space=smem, size = 0x4, offset = 0x4, fixed_abs, tag = 'smem constant byte address 0x4 - core index']
  #allocation1 [shape = 'u32[144,128]{1,0:T(1,128)}', space=vmem, size = 0x12000, scoped, tag = 'internal scratch']
  #allocation2 [shape = 'f32[16,1]{1,0:T(8,128)}', space=vmem, size = 0x2000, scoped, tag = 'scratch operand']
  #allocation3 [shape = 'f32[16,1]{1,0:T(8,128)}', space=vmem, size = 0x2000, scoped, tag = 'scratch operand']
  #allocation4 [shape = 'f32[16,1]{1,0:T(8,128)}', space=vmem, size = 0x2000, scoped, tag = 'scratch operand']
  #allocation5 [shape = 'bf16[2,8,16]{2,1,0:T(8,128)(2,1)}', space=vmem, size = 0x1000, scoped, tag = 'scratch operand']
  %s0 = inlined_call_operand.hbm [shape: bf16[16,32], index: 0, kind: input, shape index: {}]
  %s1 = inlined_call_operand.hbm [shape: f32[2,8,16], index: 1, kind: input, shape index: {}]
  %s2 = inlined_call_operand.vmem [shape: s32[2,16,1], index: 2, kind: input, shape index: {}]
  %s3 = inlined_call_operand.vmem [shape: bf16[32,256], index: 3, kind: input, shape index: {}]
  %s4 = inlined_call_operand.hbm [shape: f32[1,256], index: 4, kind: input, shape index: {}]
  %s5 = inlined_call_operand.vmem [shape: bf16[32,128], index: 5, kind: input, shape index: {}]
  %s6 = inlined_call_operand.vmem [shape: f32[1,128], index: 6, kind: input, shape index: {}]
  %s7 = inlined_call_operand.hbm [shape: f32[16,256], index: 7, kind: output, shape index: {}]
  %s8 = sld [smem:[#allocation0]]
  $region89: #{tpu_custom_call.1} parent=0
    _
  %s10 = ssub.s32 1, %s8
  %s11 = scalar_select 0, %s10, %s8
  $region1: #{tpu_custom_call.1} parent=0
    #allocation6 [shape = 'u8[4096]{0}', space=vmem, size = 0x1000, scoped, tag = 'input window, operand 0, single buffered']
    #allocation7 [shape = 's32[2]{0}', space=sflag, size = 0x8, scoped, tag = 'scoped memory for tpu_custom_call.1']
    #allocation8 [shape = 's32[2]{0}', space=sflag, size = 0x8, scoped, tag = 'scoped memory for tpu_custom_call.1']
    #allocation9 [shape = 'u8[8192]{0}', space=vmem, size = 0x2000, scoped, tag = 'input window, operand 1, single buffered']
    #allocation10 [shape = 's32[1]{0}', space=sflag, size = 0x4, scoped, tag = 'scoped memory for tpu_custom_call.1']
    #allocation11 [shape = 'u8[1024]{0}', space=vmem, size = 0x400, scoped, tag = 'input window, operand 4, single buffered']
    #allocation12 [shape = 'u8[32768]{0}', space=vmem, size = 0x8000, scoped, tag = 'output window, operand 0']
    %12 = vsyncpa [#allocation7], 0
    %13 = vsyncpa [#allocation10], 0
    %14 = vsyncpa [#allocation8], 0
    %s15 = scalar_lea.sflag [#allocation8], 1
    %16 = vsyncpa %s15, 0
    loop: start=0, step=1, limit=4
    $region2: #{tpu_custom_call.1} parent=1 // loop_pre_header
      _
    $region3: #{tpu_custom_call.1} parent=1 // loop_header
      %s18 = sphi 0, %s22
      %p19 = scmp.ge.s32.totalorder %s18, 4
      %s25 = sphi 0, %s44
      %s26 = sphi 0, %s40
      %s27 = sphi 0, %s36
      %s28 = sphi 0, %s25
      %s29 = sphi 0, %s26
      %s30 = sphi 0, %s27
      %s31 = sphi 0, %s28
      %s32 = sphi 0, %s29
      %s33 = sphi 0, %s30
      %s47 = sphi 0, %s49
      %s50 = sphi 0, %s47
      %s51 = sphi 0, %s50
      %s67 = sphi 0, %s51
      %s73 = sphi 0, %s75
      %s76 = sphi 0, %s73
      %s77 = sphi 0, %s76
      %s93 = sphi 0, %s77
      %s99 = sphi 0, %s101
      %s102 = sphi 0, %s99
      %s103 = sphi 0, %s102
      %s119 = sphi 0, %s103
      %s125 = sphi 0, %s127
      %s128 = sphi 0, %s125
      %s129 = sphi 0, %s128
      %s145 = sphi 0, %s129
      %s151 = sphi 0, %s153
      %s154 = sphi 0, %s151
      %s155 = sphi 0, %s154
      %s171 = sphi 0, %s155
      %s175 = sphi 0, %s175
      %s177 = sphi 0, %s175
      %s178 = sphi 0, %s177
      %s192 = sphi 0, %s178
      %s196 = sphi 0, %s196
      %s198 = sphi 0, %s196
      %s199 = sphi 0, %s198
      %s213 = sphi 0, %s199
      %s223 = sphi 0, %s225
      %s226 = sphi 0, %s223
      %s227 = sphi 0, %s226
      %s243 = sphi 0, %s227
    $region4: #{tpu_custom_call.1} parent=1 // loop_header_branch
      %21 = sbr.rel (%p19) target = $region8
    $region5: #{tpu_custom_call.1} parent=1 // loop_body
      %s23 = ssub.s32 %s18, 1
      %s24 = ssub.s32 %s18, 2
      %s34 = sadd.s32 1, %s27
      %p35 = scmp.ge.s32.totalorder %s34, 1
      %s36 = scalar_select %p35, 0, %s34
      %s37 = sadd.s32 1, %s26
      %s38 = scalar_select %p35, %s37, %s26
      %p39 = scmp.ge.s32.totalorder %s38, 2
      %s40 = scalar_select %p39, 0, %s38
      %s41 = sadd.s32 1, %s25
      %s42 = scalar_select %p39, %s41, %s25
      %p43 = scmp.ge.s32.totalorder %s42, 1
      %s44 = scalar_select %p43, 0, %s42
      %s45 = ssub.s32 %s25, %s44
      %p46 = scmp.eq.s32.totalorder %s45, 0
      %s48 = sadd.s32 %s47, 1
      %s49 = scalar_select %p46, %s47, %s48
      %p52 = pneg %p46
      %p53 = scmp.eq.s32.totalorder %s18, 1
      %p54 = por %p52, %p53
      %p55 = scmp.ne.s32.totalorder %s47, %s50
      %p56 = scmp.eq.s32.totalorder %s18, 0
      %p57 = por %p55, %p56
      %p58 = scmp.ne.s32.totalorder %s47, %s50
      %p59 = scmp.eq.s32.totalorder %s23, 1
      %p60 = por %p58, %p59
      %p61 = scmp.ne.s32.totalorder %s50, %s51
      %p62 = scmp.eq.s32.totalorder %s23, 0
      %p63 = por %p61, %p62
      %p64 = scmp.ne.s32.totalorder %s50, %s51
      %p65 = scmp.eq.s32.totalorder %s24, 1
      %p66 = por %p64, %p65
      %p68 = scmp.ne.s32.totalorder %s51, %s67
      %p69 = scmp.eq.s32.totalorder %s24, 0
      %p70 = por %p68, %p69
      %s71 = ssub.s32 %s25, %s44
      %p72 = scmp.eq.s32.totalorder %s71, 0
      %s74 = sadd.s32 %s73, 1
      %s75 = scalar_select %p72, %s73, %s74
      %p78 = pneg %p72
      %p79 = scmp.eq.s32.totalorder %s18, 1
      %p80 = por %p78, %p79
      %p81 = scmp.ne.s32.totalorder %s73, %s76
      %p82 = scmp.eq.s32.totalorder %s18, 0
      %p83 = por %p81, %p82
      %p84 = scmp.ne.s32.totalorder %s73, %s76
      %p85 = scmp.eq.s32.totalorder %s23, 1
      %p86 = por %p84, %p85
      %p87 = scmp.ne.s32.totalorder %s76, %s77
      %p88 = scmp.eq.s32.totalorder %s23, 0
      %p89 = por %p87, %p88
      %p90 = scmp.ne.s32.totalorder %s76, %s77
      %p91 = scmp.eq.s32.totalorder %s24, 1
      %p92 = por %p90, %p91
      %p94 = scmp.ne.s32.totalorder %s77, %s93
      %p95 = scmp.eq.s32.totalorder %s24, 0
      %p96 = por %p94, %p95
      %s97 = ssub.s32 %s25, %s44
      %p98 = scmp.eq.s32.totalorder %s97, 0
      %s100 = sadd.s32 %s99, 1
      %s101 = scalar_select %p98, %s99, %s100
      %p104 = pneg %p98
      %p105 = scmp.eq.s32.totalorder %s18, 1
      %p106 = por %p104, %p105
      %p107 = scmp.ne.s32.totalorder %s99, %s102
      %p108 = scmp.eq.s32.totalorder %s18, 0
      %p109 = por %p107, %p108
      %p110 = scmp.ne.s32.totalorder %s99, %s102
      %p111 = scmp.eq.s32.totalorder %s23, 1
      %p112 = por %p110, %p111
      %p113 = scmp.ne.s32.totalorder %s102, %s103
      %p114 = scmp.eq.s32.totalorder %s23, 0
      %p115 = por %p113, %p114
      %p116 = scmp.ne.s32.totalorder %s102, %s103
      %p117 = scmp.eq.s32.totalorder %s24, 1
      %p118 = por %p116, %p117
      %p120 = scmp.ne.s32.totalorder %s103, %s119
      %p121 = scmp.eq.s32.totalorder %s24, 0
      %p122 = por %p120, %p121
      %s123 = ssub.s32 %s27, %s36
      %p124 = scmp.eq.s32.totalorder %s123, 0
      %s126 = sadd.s32 %s125, 1
      %s127 = scalar_select %p124, %s125, %s126
      %p130 = pneg %p124
      %p131 = scmp.eq.s32.totalorder %s18, 1
      %p132 = por %p130, %p131
      %p133 = scmp.ne.s32.totalorder %s125, %s128
      %p134 = scmp.eq.s32.totalorder %s18, 0
      %p135 = por %p133, %p134
      %p136 = scmp.ne.s32.totalorder %s125, %s128
      %p137 = scmp.eq.s32.totalorder %s23, 1
      %p138 = por %p136, %p137
      %p139 = scmp.ne.s32.totalorder %s128, %s129
      %p140 = scmp.eq.s32.totalorder %s23, 0
      %p141 = por %p139, %p140
      %p142 = scmp.ne.s32.totalorder %s128, %s129
      %p143 = scmp.eq.s32.totalorder %s24, 1
      %p144 = por %p142, %p143
      %p146 = scmp.ne.s32.totalorder %s129, %s145
      %p147 = scmp.eq.s32.totalorder %s24, 0
      %p148 = por %p146, %p147
      %s149 = ssub.s32 %s27, %s36
      %p150 = scmp.eq.s32.totalorder %s149, 0
      %s152 = sadd.s32 %s151, 1
      %s153 = scalar_select %p150, %s151, %s152
      %p156 = pneg %p150
      %p157 = scmp.eq.s32.totalorder %s18, 1
      %p158 = por %p156, %p157
      %p159 = scmp.ne.s32.totalorder %s151, %s154
      %p160 = scmp.eq.s32.totalorder %s18, 0
      %p161 = por %p159, %p160
      %p162 = scmp.ne.s32.totalorder %s151, %s154
      %p163 = scmp.eq.s32.totalorder %s23, 1
      %p164 = por %p162, %p163
      %p165 = scmp.ne.s32.totalorder %s154, %s155
      %p166 = scmp.eq.s32.totalorder %s23, 0
      %p167 = por %p165, %p166
      %p168 = scmp.ne.s32.totalorder %s154, %s155
      %p169 = scmp.eq.s32.totalorder %s24, 1
      %p170 = por %p168, %p169
      %p172 = scmp.ne.s32.totalorder %s155, %s171
      %p173 = scmp.eq.s32.totalorder %s24, 0
      %p174 = por %p172, %p173
      %s176 = sadd.s32 %s175, 1
      %p179 = scmp.eq.s32.totalorder %s18, 1
      %p180 = scmp.ne.s32.totalorder %s175, %s177
      %p181 = scmp.eq.s32.totalorder %s18, 0
      %p182 = por %p180, %p181
      %p183 = scmp.ne.s32.totalorder %s175, %s177
      %p184 = scmp.eq.s32.totalorder %s23, 1
      %p185 = por %p183, %p184
      %p186 = scmp.ne.s32.totalorder %s177, %s178
      %p187 = scmp.eq.s32.totalorder %s23, 0
      %p188 = por %p186, %p187
      %p189 = scmp.ne.s32.totalorder %s177, %s178
      %p190 = scmp.eq.s32.totalorder %s24, 1
      %p191 = por %p189, %p190
      %p193 = scmp.ne.s32.totalorder %s178, %s192
      %p194 = scmp.eq.s32.totalorder %s24, 0
      %p195 = por %p193, %p194
      %s197 = sadd.s32 %s196, 1
      %p200 = scmp.eq.s32.totalorder %s18, 1
      %p201 = scmp.ne.s32.totalorder %s196, %s198
      %p202 = scmp.eq.s32.totalorder %s18, 0
      %p203 = por %p201, %p202
      %p204 = scmp.ne.s32.totalorder %s196, %s198
      %p205 = scmp.eq.s32.totalorder %s23, 1
      %p206 = por %p204, %p205
      %p207 = scmp.ne.s32.totalorder %s198, %s199
      %p208 = scmp.eq.s32.totalorder %s23, 0
      %p209 = por %p207, %p208
      %p210 = scmp.ne.s32.totalorder %s198, %s199
      %p211 = scmp.eq.s32.totalorder %s24, 1
      %p212 = por %p210, %p211
      %p214 = scmp.ne.s32.totalorder %s199, %s213
      %p215 = scmp.eq.s32.totalorder %s24, 0
      %p216 = por %p214, %p215
      %s217 = smul.u32 %s27, %s26
      %s218 = smul.u32 %s36, %s40
      %s219 = ssub.s32 %s25, %s44
      %s220 = ssub.s32 %s217, %s218
      %s221 = sor.u32 %s219, %s220
      %p222 = scmp.eq.s32.totalorder %s221, 0
      %s224 = sadd.s32 %s223, 1
      %s225 = scalar_select %p222, %s223, %s224
      %p228 = pneg %p222
      %p229 = scmp.eq.s32.totalorder %s18, 1
      %p230 = por %p228, %p229
      %p231 = scmp.ne.s32.totalorder %s223, %s226
      %p232 = scmp.eq.s32.totalorder %s18, 0
      %p233 = por %p231, %p232
      %p234 = scmp.ne.s32.totalorder %s223, %s226
      %p235 = scmp.eq.s32.totalorder %s23, 1
      %p236 = por %p234, %p235
      %p237 = scmp.ne.s32.totalorder %s226, %s227
      %p238 = scmp.eq.s32.totalorder %s23, 0
      %p239 = por %p237, %p238
      %p240 = scmp.ne.s32.totalorder %s226, %s227
      %p241 = scmp.eq.s32.totalorder %s24, 1
      %p242 = por %p240, %p241
      %p244 = scmp.ne.s32.totalorder %s227, %s243
      %p245 = scmp.eq.s32.totalorder %s24, 0
      %p246 = por %p244, %p245
      %p247 = scmp.le.s32.totalorder 1, %s18
      %p248 = scmp.lt.s32.totalorder %s18, 3
      %p249 = pnand %p247, %p248
      %p250 = pneg %p249
      // Predicated region
      $region9: #{tpu_custom_call.1} parent=5 // pred_check
        _
      $region10: #{tpu_custom_call.1} parent=5 // pred_check_branch
        %252 = sbr.rel (%p249) target = $region12
      $region11: #{tpu_custom_call.1} parent=5 // pred_region
        %s253 = ssub.s32 %s18, 1
        // Predicated region
        $region13: #{tpu_custom_call.1} parent=11 // pred_check
          %p254 = pneg %p63
        $region14: #{tpu_custom_call.1} parent=11 // pred_check_branch
          %256 = sbr.rel (%p254) target = $region16
        $region15: #{tpu_custom_call.1} parent=11 // pred_region
          %s257 = smul.u32 2, %s28
          %s259 = ssub.s32 128, 128
          %260 = vsyncadd [#allocation7], %s259
          %s261 = smul.addr %s257, 64
          %s262 = scalar_lea.hbm %s0, %s261
          %s263 = sshll.u32 [#allocation6], 4
          %s264 = int_to_ptr.vmem [resolvable:$true] %s263
          %269 = dma.hbm_to_vmem [thread:$0]  %s262, 128, %s264, [#allocation7], 64, 64, 4
        $region16: #{tpu_custom_call.1} parent=11 // pred_fallthru
          _
        // Predicated region
        $region17: #{tpu_custom_call.1} parent=11 // pred_check
          %p270 = pneg %p89
        $region18: #{tpu_custom_call.1} parent=11 // pred_check_branch
          %272 = sbr.rel (%p270) target = $region20
        $region19: #{tpu_custom_call.1} parent=11 // pred_region
          %s273 = smul.u32 2, %s28
          %s275 = ssub.s32 256, 256
          %276 = vsyncadd [#allocation10], %s275
          %s277 = smul.addr %s273, 128
          %s278 = scalar_lea.hbm %s1, %s277
          %s279 = sshll.u32 [#allocation9], 4
          %s280 = int_to_ptr.vmem [resolvable:$true] %s279
          %285 = dma.hbm_to_vmem [thread:$0]  %s278, 256, %s280, [#allocation10], 128, 128, 8
        $region20: #{tpu_custom_call.1} parent=11 // pred_fallthru
          _
        // Predicated region
        $region21: #{tpu_custom_call.1} parent=11 // pred_check
          %p286 = pneg %p115
        $region22: #{tpu_custom_call.1} parent=11 // pred_check_branch
          %288 = sbr.rel (%p286) target = $region24
        $region23: #{tpu_custom_call.1} parent=11 // pred_region
          %s289 = smul.u32 2, %s28
          %p290 = scmp.lt.s32.totalorder %s289, 1
          %s291 = scalar_select %p290, %s289, 1
          %s292 = smul.addr %s291, 2
          %s293 = smul.addr %s292, 8
          %s294 = scalar_lea.vmem %s2, %s293
          %s295 = smul.u32 2, %s28
        $region24: #{tpu_custom_call.1} parent=11 // pred_fallthru
          _
        // Predicated region
        $region25: #{tpu_custom_call.1} parent=11 // pred_check
          %p296 = pneg %p141
        $region26: #{tpu_custom_call.1} parent=11 // pred_check_branch
          %298 = sbr.rel (%p296) target = $region28
        $region27: #{tpu_custom_call.1} parent=11 // pred_region
          %s299 = smul.u32 2, %s30
          %p300 = scmp.lt.s32.totalorder %s299, 1
          %s301 = scalar_select %p300, %s299, 1
          %s302 = smul.addr %s301, 4
          %s303 = scalar_lea.vmem %s3, %s302
          %s304 = smul.u32 2, %s30
        $region28: #{tpu_custom_call.1} parent=11 // pred_fallthru
          _
        // Predicated region
        $region29: #{tpu_custom_call.1} parent=11 // pred_check
          %p305 = pneg %p167
        $region30: #{tpu_custom_call.1} parent=11 // pred_check_branch
          %307 = sbr.rel (%p305) target = $region32
        $region31: #{tpu_custom_call.1} parent=11 // pred_region
          %s308 = smul.u32 2, %s30
          %s310 = ssub.s32 32, 32
          %311 = vsyncadd [#allocation10], %s310
          %s312 = smul.addr %s308, 16
          %s313 = scalar_lea.hbm %s4, %s312
          %s315 = sshll.u32 [#allocation11], 4
          %s316 = int_to_ptr.vmem [resolvable:$true] %s315
          %318 = dma.hbm_to_vmem [thread:$0]  %s313, 32, %s316, [#allocation10]
        $region32: #{tpu_custom_call.1} parent=11 // pred_fallthru
          _
        // Predicated region
        $region33: #{tpu_custom_call.1} parent=11 // pred_check
          %p319 = pneg %p188
        $region34: #{tpu_custom_call.1} parent=11 // pred_check_branch
          %321 = sbr.rel (%p319) target = $region36
        $region35: #{tpu_custom_call.1} parent=11 // pred_region
          _
        $region36: #{tpu_custom_call.1} parent=11 // pred_fallthru
          _
        // Predicated region
        $region37: #{tpu_custom_call.1} parent=11 // pred_check
          %p322 = pneg %p209
        $region38: #{tpu_custom_call.1} parent=11 // pred_check_branch
          %324 = sbr.rel (%p322) target = $region40
        $region39: #{tpu_custom_call.1} parent=11 // pred_region
          _
        $region40: #{tpu_custom_call.1} parent=11 // pred_fallthru
          _
      $region12: #{tpu_custom_call.1} parent=5 // pred_fallthru
        _
      %p325 = scmp.lt.s32.totalorder %s18, 2
      // Predicated region
      $region41: #{tpu_custom_call.1} parent=5 // pred_check
        %p326 = pneg %p325
      $region42: #{tpu_custom_call.1} parent=5 // pred_check_branch
        %328 = sbr.rel (%p326) target = $region44
      $region43: #{tpu_custom_call.1} parent=5 // pred_region
        _
      $region44: #{tpu_custom_call.1} parent=5 // pred_fallthru
        _
      %p329 = scmp.le.s32.totalorder 1, %s18
      %p330 = scmp.lt.s32.totalorder %s18, 3
      %p331 = pnand %p329, %p330
      %p332 = pneg %p331
      // Predicated region
      $region45: #{tpu_custom_call.1} parent=5 // pred_check
        _
      $region46: #{tpu_custom_call.1} parent=5 // pred_check_branch
        %334 = sbr.rel (%p331) target = $region48
      $region47: #{tpu_custom_call.1} parent=5 // pred_region
        %s335 = ssub.s32 %s18, 1
        // Predicated region
        $region49: #{tpu_custom_call.1} parent=47 // pred_check
          %p336 = pneg %p63
        $region50: #{tpu_custom_call.1} parent=47 // pred_check_branch
          %338 = sbr.rel (%p336) target = $region52
        $region51: #{tpu_custom_call.1} parent=47 // pred_region
          %339 = dma.done [#allocation7], 128
        $region52: #{tpu_custom_call.1} parent=47 // pred_fallthru
          _
        // Predicated region
        $region53: #{tpu_custom_call.1} parent=47 // pred_check
          %p340 = pneg %p89
        $region54: #{tpu_custom_call.1} parent=47 // pred_check_branch
          %342 = sbr.rel (%p340) target = $region56
        $region55: #{tpu_custom_call.1} parent=47 // pred_region
          %343 = dma.done [#allocation10], 256
        $region56: #{tpu_custom_call.1} parent=47 // pred_fallthru
          _
        // Predicated region
        $region57: #{tpu_custom_call.1} parent=47 // pred_check
          %p344 = pneg %p167
        $region58: #{tpu_custom_call.1} parent=47 // pred_check_branch
          %346 = sbr.rel (%p344) target = $region60
        $region59: #{tpu_custom_call.1} parent=47 // pred_region
          %347 = dma.done [#allocation10], 32
        $region60: #{tpu_custom_call.1} parent=47 // pred_fallthru
          _
        %p348 = pneg %p63
        %p349 = pneg %p60
        %p350 = pneg %p89
        %p351 = pneg %p86
        %s352 = smul.u32 2, %s28
        %p353 = scmp.lt.s32.totalorder %s352, 1
        %s354 = scalar_select %p353, %s352, 1
        %s355 = smul.addr %s354, 2
        %s356 = smul.addr %s355, 8
        %s357 = scalar_lea.vmem %s2, %s356
        %p358 = pneg %p115
        %p359 = pneg %p112
        %s360 = smul.u32 2, %s30
        %p361 = scmp.lt.s32.totalorder %s360, 1
        %s362 = scalar_select %p361, %s360, 1
        %s363 = smul.addr %s362, 4
        %s364 = scalar_lea.vmem %s3, %s363
        %p365 = pneg %p141
        %p366 = pneg %p138
        %p367 = pneg %p167
        %p368 = pneg %p164
        %p369 = pneg %p188
        %p370 = pneg %p185
        %p371 = pneg %p209
        %p372 = pneg %p206
        %p373 = pneg %p239
        %p374 = pneg %p236
        %s375 = sand.u32 %s226, 1
        %s376 = scalar_lea.sflag [#allocation8], %s375
        %s377 = sand.u32 %s226, 1
        %s378 = smul.addr %s377, 32
        %s379 = scalar_lea.vmem [#allocation12], %s378
        %s380 = smul.u32 2, %s28
        %s381 = smul.u32 2, %s28
        %s382 = smul.u32 2, %s28
        %p383 = scmp.lt.s32.totalorder %s382, 1
        %s384 = scalar_select %p383, %s382, 1
        %s385 = smul.addr %s384, 2
        %s386 = smul.addr %s385, 8
        %s387 = scalar_lea.vmem %s2, %s386
        %s388 = smul.u32 2, %s28
        %s389 = smul.u32 2, %s30
        %p390 = scmp.lt.s32.totalorder %s389, 1
        %s391 = scalar_select %p390, %s389, 1
        %s392 = smul.addr %s391, 4
        %s393 = scalar_lea.vmem %s3, %s392
        %s394 = smul.u32 2, %s30
        %s395 = smul.u32 2, %s30
        %s396 = smul.u32 %s30, %s29
        %s397 = smul.u32 2, %s28
        %s398 = smul.u32 2, %s396
        %v400 = vld [vmem:[#allocation6] sm:$0xf]
        %v401 = vld [vmem:[#allocation6 + $0x4] sm:$0xf]
        %p402 = scmp.eq.s32.totalorder %s29, 0
        %p403 = scmp.eq.s32.totalorder %s30, 0
        %p404 = pnand %p402, %p403
        %p405 = pneg %p404
        // Predicated region
        $region61: #{tpu_custom_call.1} parent=47 // pred_check
          _
        $region62: #{tpu_custom_call.1} parent=47 // pred_check_branch
          %407 = sbr.rel (%p404) target = $region64
        $region63: #{tpu_custom_call.1} parent=47 // pred_region
          %vm408 = vcmask 7168
          %409 = vst.msk [vmem:[#allocation2] sm:$0xff] %vm408, -1e+30
          %410 = vst.msk [vmem:[#allocation2 + $0x8] sm:$0xff] %vm408, -1e+30
          %411 = vst.msk [vmem:[#allocation3] sm:$0xff] %vm408, 0.0
          %412 = vst.msk [vmem:[#allocation3 + $0x8] sm:$0xff] %vm408, 0.0
          %v413 = vld [vmem:[%s5] sm:$0xf]
          %v414 = vld [vmem:[%s5 + $0x4] sm:$0xf]
          %v415 = vld [vmem:[%s5 + $0x8] sm:$0xf]
          %v416 = vld [vmem:[%s5 + $0xc] sm:$0xf]
          %v417 = vld [vmem:[%s6] sm:$0x1]
          %v419 = vlaneseq
          %v420 = vshrl.u32 %v419, 7
          %v421 = vsub.s32 0, %v420
          %v422 = vrot.slane %v417, %v421
          %v426 = vunpack.c.l.b16 %v400
          %v427 = vunpack.c.l.b16 %v401
          %v428 = vpack.c.b16 %v427, %v426
          %v433 = vunpack.c.l.b16 %v413
          %v434 = vunpack.c.l.b16 %v414
          %v435 = vunpack.c.l.b16 %v415
          %v436 = vunpack.c.l.b16 %v416
          %v437 = vpack.c.b16 %v434, %v433
          %v438 = vpack.c.b16 %v436, %v435
          %vm441 = vcmask 261120
          %v443 = vsel %vm441, %v428, 0
          %445 = vmatprep.subr.bf16.mxu0 0
          %446 = vmatpush1.bf16.msra.mxu0 %v437
          %447 = vmatprep.subr.bf16.mxu0 0
          %448 = vmatpush1.bf16.msra.mxu0 %v438
          %449 = vmatprep.subr.bf16.mxu0 0
          %450 = vmatpush1.bf16.msra.mxu0 0
          %451 = vmatprep.subr.bf16.mxu0 0
          %452 = vmatpush1.bf16.msra.mxu0 0
          %453 = vmatprep.subr.bf16.mxu0 0
          %454 = vmatpush1.bf16.msra.mxu0 0
          %455 = vmatprep.subr.bf16.mxu0 0
          %456 = vmatpush1.bf16.msra.mxu0 0
          %457 = vmatprep.subr.bf16.mxu0 0
          %458 = vmatpush1.bf16.msra.mxu0 0
          %459 = vmatprep.subr.bf16.mxu0 0
          %460 = vmatpush1.bf16.msra.mxu0 0
          %461 = vmatprep.subr.bf16.mxu0 0
          %462 = vmatpush1.bf16.msra.mxu0 0
          %463 = vmatprep.subr.bf16.mxu0 0
          %464 = vmatpush1.bf16.msra.mxu0 0
          %465 = vmatprep.subr.bf16.mxu0 0
          %466 = vmatpush1.bf16.msra.mxu0 0
          %467 = vmatprep.subr.bf16.mxu0 0
          %468 = vmatpush1.bf16.msra.mxu0 0
          %469 = vmatprep.subr.bf16.mxu0 0
          %470 = vmatpush1.bf16.msra.mxu0 0
          %471 = vmatprep.subr.bf16.mxu0 0
          %472 = vmatpush1.bf16.msra.mxu0 0
          %473 = vmatprep.subr.bf16.mxu0 0
          %474 = vmatpush1.bf16.msra.mxu0 0
          %475 = vmatprep.subr.bf16.mxu0 0
          %476 = vmatpush1.bf16.msra.mxu0 0
          %477 = vmatprep.mubr.bf16.mxu0 0
          %478 = vmatmul.mubr.bf16.gmra.mrb[0].mxu0 %v443
          %v479 = vpop.f32.mrb[0].mxu0
          %v480 = vadd.f32 %v422, %v479
          %v481 = vpop.f32.mrb[0].mxu0
          %v482 = vpop.f32.mrb[0].mxu0
          %v483 = vadd.f32 %v422, %v482
          %v484 = vpop.f32.mrb[0].mxu0
          %485 = vdwg.mxu0
          %v486 = vxor.u32 %v480, 2147483648
          %v487 = vxor.u32 %v483, 2147483648
          %v488 = vmul.f32 %v486, 1.442695
          %v489 = vpow.pop %v488
          %v490 = vmul.f32 %v487, 1.442695
          %v491 = vpow.pop %v490
          %v492 = vadd.f32 %v489, 1.0
          %v493 = vadd.f32 %v491, 1.0
          %v494 = vrcp.pop %v492
          %v495 = vmul.f32 1.0, %v494
          %v496 = vrcp.pop %v493
          %v497 = vmul.f32 1.0, %v496
          %498 = vst.msk [vmem:[#allocation4] sm:$0xff] %vm408, %v495
          %499 = vst.msk [vmem:[#allocation4 + $0x8] sm:$0xff] %vm408, %v497
        $region64: #{tpu_custom_call.1} parent=47 // pred_fallthru
          _
        %v500 = vld [vmem:[%s393] sm:$0xff]
        %v501 = vld [vmem:[%s393 + $0x8] sm:$0xff]
        %v502 = vld [vmem:[%s393 + $0x10] sm:$0xff]
        %v503 = vld [vmem:[%s393 + $0x18] sm:$0xff]
        %v504 = vld [vmem:[#allocation11] sm:$0x3]
        %v506 = vlaneseq
        %v507 = vshrl.u32 %v506, 7
        %v508 = vsub.s32 0, %v507
        %v509 = vrot.slane %v504, %v508
        %v510 = vlaneseq
        %v511 = vshrl.u32 %v510, 7
        %v512 = vsub.s32 1, %v511
        %v513 = vrot.slane %v504, %v512
        %v518 = vunpack.c.l.b16 %v400
        %v519 = vunpack.c.l.b16 %v401
        %v520 = vpack.c.b16 %v519, %v518
        %v525 = vunpack.c.l.b16 %v500
        %v526 = vunpack.c.h.b16 %v500
        %v527 = vunpack.c.l.b16 %v501
        %v528 = vunpack.c.h.b16 %v501
        %v529 = vunpack.c.l.b16 %v502
        %v530 = vunpack.c.h.b16 %v502
        %v531 = vunpack.c.l.b16 %v503
        %v532 = vunpack.c.h.b16 %v503
        %v533 = vpack.c.b16 %v527, %v525
        %v534 = vpack.c.b16 %v528, %v526
        %v535 = vpack.c.b16 %v531, %v529
        %v536 = vpack.c.b16 %v532, %v530
        %vm541 = vcmask 261120
        %v543 = vsel %vm541, %v520, 0
        %545 = vmatprep.subr.bf16.mxu0 %v534
        %546 = vmatpush1.bf16.msra.mxu0 %v533
        %547 = vmatprep.subr.bf16.mxu0 %v536
        %548 = vmatpush1.bf16.msra.mxu0 %v535
        %549 = vmatprep.subr.bf16.mxu0 0
        %550 = vmatpush1.bf16.msra.mxu0 0
        %551 = vmatprep.subr.bf16.mxu0 0
        %552 = vmatpush1.bf16.msra.mxu0 0
        %553 = vmatprep.subr.bf16.mxu0 0
        %554 = vmatpush1.bf16.msra.mxu0 0
        %555 = vmatprep.subr.bf16.mxu0 0
        %556 = vmatpush1.bf16.msra.mxu0 0
        %557 = vmatprep.subr.bf16.mxu0 0
        %558 = vmatpush1.bf16.msra.mxu0 0
        %559 = vmatprep.subr.bf16.mxu0 0
        %560 = vmatpush1.bf16.msra.mxu0 0
        %561 = vmatprep.subr.bf16.mxu0 0
        %562 = vmatpush1.bf16.msra.mxu0 0
        %563 = vmatprep.subr.bf16.mxu0 0
        %564 = vmatpush1.bf16.msra.mxu0 0
        %565 = vmatprep.subr.bf16.mxu0 0
        %566 = vmatpush1.bf16.msra.mxu0 0
        %567 = vmatprep.subr.bf16.mxu0 0
        %568 = vmatpush1.bf16.msra.mxu0 0
        %569 = vmatprep.subr.bf16.mxu0 0
        %570 = vmatpush1.bf16.msra.mxu0 0
        %571 = vmatprep.subr.bf16.mxu0 0
        %572 = vmatpush1.bf16.msra.mxu0 0
        %573 = vmatprep.subr.bf16.mxu0 0
        %574 = vmatpush1.bf16.msra.mxu0 0
        %575 = vmatprep.subr.bf16.mxu0 0
        %576 = vmatpush1.bf16.msra.mxu0 0
        %577 = vmatprep.mubr.bf16.mxu0 0
        %578 = vmatmul.mubr.bf16.gmra.mrb[0].mxu0 %v543
        %v579 = vpop.f32.mrb[0].mxu0
        %v580 = vadd.f32 %v509, %v579
        %v581 = vpop.f32.mrb[0].mxu0
        %v582 = vadd.f32 %v513, %v581
        %v583 = vpop.f32.mrb[0].mxu0
        %v584 = vadd.f32 %v509, %v583
        %v585 = vpop.f32.mrb[0].mxu0
        %v586 = vadd.f32 %v513, %v585
        %587 = vdwg.mxu0
        // Predicated region
        $region65: #{tpu_custom_call.1} parent=47 // pred_check
          %p588 = pneg %p402
        $region66: #{tpu_custom_call.1} parent=47 // pred_check_branch
          %590 = sbr.rel (%p588) target = $region68
        $region67: #{tpu_custom_call.1} parent=47 // pred_region
          %v591 = vld [vmem:[#allocation2] sm:$0xff]
          %v592 = vld [vmem:[#allocation2 + $0x8] sm:$0xff]
          %v593 = vmax.f32 %v580, %v582
          %594 = vmax.xlane.f32.xlu0 %v593
          %v595 = vpop.xlane.xlu0 %594
          %v596 = vmax.f32 %v584, %v586
          %597 = vmax.xlane.f32.xlu0 %v596
          %v598 = vpop.xlane.xlu0 %597
          %v599 = vmax.f32 %v591, %v595
          %v600 = vmax.f32 %v592, %v598
          %v601 = vld [vmem:[#allocation3] sm:$0xff]
          %v602 = vld [vmem:[#allocation3 + $0x8] sm:$0xff]
          %v603 = vsub.f32 %v591, %v599
          %v604 = vsub.f32 %v592, %v600
          %v605 = vmul.f32 %v603, 1.442695
          %v606 = vpow.pop %v605
          %v607 = vmul.f32 %v604, 1.442695
          %v608 = vpow.pop %v607
          %v609 = vmul.f32 %v601, %v606
          %v610 = vmul.f32 %v602, %v608
          %612 = vset.pattern.permute.xlu0 0
          %613 = vperm.xlu0 %612, %v599
          %v614 = vpop.permute.xlu0 %613
          %617 = vset.pattern.permute.xlu0 0
          %618 = vperm.xlu0 %617, %v600
          %v619 = vpop.permute.xlu0 %618
          %v621 = vsub.f32 %v580, %v614
          %v622 = vsub.f32 %v582, %v614
          %v623 = vsub.f32 %v584, %v619
          %v624 = vsub.f32 %v586, %v619
          %v625 = vmul.f32 %v621, 1.442695
          %v626 = vpow.pop %v625
          %v627 = vmul.f32 %v622, 1.442695
          %v628 = vpow.pop %v627
          %v629 = vmul.f32 %v623, 1.442695
          %v630 = vpow.pop %v629
          %v631 = vmul.f32 %v624, 1.442695
          %v632 = vpow.pop %v631
          %v633 = vadd.f32 %v626, %v628
          %634 = vadd.xlane.f32.xlu0 %v633
          %v635 = vpop.xlane.xlu0 %634
          %v636 = vadd.f32 %v630, %v632
          %637 = vadd.xlane.f32.xlu0 %v636
          %v638 = vpop.xlane.xlu0 %637
          %v639 = vadd.f32 %v609, %v635
          %v640 = vadd.f32 %v610, %v638
          %vm641 = vcmask 7168
          %642 = vst.msk [vmem:[#allocation3] sm:$0xff] %vm641, %v639
          %643 = vst.msk [vmem:[#allocation3 + $0x8] sm:$0xff] %vm641, %v640
          %644 = vst.msk [vmem:[#allocation2] sm:$0xff] %vm641, %v599
          %645 = vst.msk [vmem:[#allocation2 + $0x8] sm:$0xff] %vm641, %v600
        $region68: #{tpu_custom_call.1} parent=47 // pred_fallthru
          _
        %p646 = scmp.eq.s32.totalorder %s29, 1
        %p647 = pnand %p646, %p403
        %p648 = pneg %p647
        // Predicated region
        $region69: #{tpu_custom_call.1} parent=47 // pred_check
          _
        $region70: #{tpu_custom_call.1} parent=47 // pred_check_branch
          %650 = sbr.rel (%p647) target = $region72
        $region71: #{tpu_custom_call.1} parent=47 // pred_region
          %v651 = vld [vmem:[#allocation4] sm:$0xff]
          %v652 = vld [vmem:[#allocation4 + $0x8] sm:$0xff]
          %v653 = vsub.f32 1.0, %v651
          %v654 = vsub.f32 1.0, %v652
          %v655 = vld [vmem:[#allocation9] sm:$0xff]
          %v656 = vld [vmem:[#allocation9 + $0x8] sm:$0xff]
          %658 = vset.pattern.permute.xlu0 0
          %659 = vperm.xlu0 %658, %v653
          %v660 = vpop.permute.xlu0 %659
          %663 = vset.pattern.permute.xlu0 0
          %664 = vperm.xlu0 %663, %v654
          %v665 = vpop.permute.xlu0 %664
          %v667 = vmul.f32 %v655, %v660
          %v668 = vmul.f32 %v656, %v665
          %v669 = vpack.c.bf16 %v667, %v667
          %v670 = vpack.c.bf16 %v668, %v668
          %vm671 = vcmask 125952
          %672 = vst.msk [vmem:[#allocation5] sm:$0xf] %vm671, %v669
          %673 = vst.msk [vmem:[#allocation5 + $0x4] sm:$0xf] %vm671, %v670
        $region72: #{tpu_custom_call.1} parent=47 // pred_fallthru
          _
        // Predicated region
        $region73: #{tpu_custom_call.1} parent=47 // pred_check
          %p674 = pneg %p646
        $region74: #{tpu_custom_call.1} parent=47 // pred_check_branch
          %676 = sbr.rel (%p674) target = $region76
        $region75: #{tpu_custom_call.1} parent=47 // pred_region
          %v677 = vld [vmem:[#allocation4] sm:$0xff]
          %v678 = vld [vmem:[#allocation4 + $0x8] sm:$0xff]
          %v679 = vld [vmem:[#allocation3] sm:$0xff]
          %v680 = vld [vmem:[#allocation3 + $0x8] sm:$0xff]
          %v681 = vrcp.pop %v679
          %v682 = vrcp.pop %v680
          %v683 = vld [vmem:[#allocation2] sm:$0xff]
          %v684 = vld [vmem:[#allocation2 + $0x8] sm:$0xff]
          %686 = vset.pattern.permute.xlu0 0
          %687 = vperm.xlu0 %686, %v683
          %v688 = vpop.permute.xlu0 %687
          %691 = vset.pattern.permute.xlu0 0
          %692 = vperm.xlu0 %691, %v684
          %v693 = vpop.permute.xlu0 %692
          %v695 = vsub.f32 %v580, %v688
          %v696 = vsub.f32 %v582, %v688
          %v697 = vsub.f32 %v584, %v693
          %v698 = vsub.f32 %v586, %v693
          %v699 = vmul.f32 %v695, 1.442695
          %v700 = vpow.pop %v699
          %v701 = vmul.f32 %v696, 1.442695
          %v702 = vpow.pop %v701
          %v703 = vmul.f32 %v697, 1.442695
          %v704 = vpow.pop %v703
          %v705 = vmul.f32 %v698, 1.442695
          %v706 = vpow.pop %v705
          %v707 = vmul.f32 %v677, %v681
          %v708 = vmul.f32 %v678, %v682
          %710 = vset.pattern.permute.xlu0 0
          %711 = vperm.xlu0 %710, %v707
          %v712 = vpop.permute.xlu0 %711
          %715 = vset.pattern.permute.xlu0 0
          %716 = vperm.xlu0 %715, %v708
          %v717 = vpop.permute.xlu0 %716
          %v719 = vmul.f32 %v700, %v712
          %v720 = vmul.f32 %v702, %v712
          %v721 = vmul.f32 %v704, %v717
          %v722 = vmul.f32 %v706, %v717
          %s723 = smul.u32 %s30, 256
          %v724 = vlaneseq
          %v725 = vand.u32 %v724, 127
          %v726 = vadd.s32 %v725, 128
          %v727 = vstv %s723
          %v728 = vadd.s32 %v727, %v725
          %v729 = vadd.s32 %v727, %v726
          %v730 = vld [vmem:[%s387] sm:$0xff]
          %v731 = vld [vmem:[%s387 + $0x8] sm:$0xff]
          %v732 = vld [vmem:[%s387 + $0x10] sm:$0xff]
          %v733 = vld [vmem:[%s387 + $0x18] sm:$0xff]
          %734 = vset.pattern.permute.xlu0 0
          %735 = vperm.xlu0 %734, %v730
          %v736 = vpop.permute.xlu0 %735
          %737 = vset.pattern.permute.xlu0 0
          %738 = vperm.xlu0 %737, %v731
          %v739 = vpop.permute.xlu0 %738
          %740 = vset.pattern.permute.xlu0 0
          %741 = vperm.xlu0 %740, %v732
          %v742 = vpop.permute.xlu0 %741
          %743 = vset.pattern.permute.xlu0 0
          %744 = vperm.xlu0 %743, %v733
          %v745 = vpop.permute.xlu0 %744
          %vm746 = vcmp.eq.s32.totalorder %v736, %v728
          %vm747 = vcmp.eq.s32.totalorder %v736, %v729
          %vm748 = vcmp.eq.s32.totalorder %v739, %v728
          %vm749 = vcmp.eq.s32.totalorder %v739, %v729
          %vm750 = vcmp.eq.s32.totalorder %v742, %v728
          %vm751 = vcmp.eq.s32.totalorder %v742, %v729
          %vm752 = vcmp.eq.s32.totalorder %v745, %v728
          %vm753 = vcmp.eq.s32.totalorder %v745, %v729
          %v754 = vsel %vm746, 1, 0
          %v755 = vsel %vm747, 1, 0
          %v756 = vsel %vm748, 1, 0
          %v757 = vsel %vm749, 1, 0
          %v758 = vsel %vm750, 1, 0
          %v759 = vsel %vm751, 1, 0
          %v760 = vsel %vm752, 1, 0
          %v761 = vsel %vm753, 1, 0
          %v762 = vcvt.s32.f32 %v754
          %v763 = vcvt.s32.f32 %v755
          %v764 = vcvt.s32.f32 %v756
          %v765 = vcvt.s32.f32 %v757
          %v766 = vcvt.s32.f32 %v758
          %v767 = vcvt.s32.f32 %v759
          %v768 = vcvt.s32.f32 %v760
          %v769 = vcvt.s32.f32 %v761
          %v770 = vpack.c.bf16 %v764, %v762
          %v771 = vpack.c.bf16 %v765, %v763
          %v772 = vpack.c.bf16 %v768, %v766
          %v773 = vpack.c.bf16 %v769, %v767
          %v774 = vld [vmem:[#allocation5] sm:$0xf]
          %v775 = vld [vmem:[#allocation5 + $0x4] sm:$0xf]
          %vm776 = vcmask 130048
          %v778 = vsel %vm776, %v774, 0
          %780 = vmatprep.subr.bf16.mxu0 %v771
          %781 = vmatpush1.bf16.msra.mxu0 %v770
          %782 = vmatprep.subr.bf16.mxu0 0
          %783 = vmatpush1.bf16.msra.mxu0 0
          %784 = vmatprep.subr.bf16.mxu0 0
          %785 = vmatpush1.bf16.msra.mxu0 0
          %786 = vmatprep.subr.bf16.mxu0 0
          %787 = vmatpush1.bf16.msra.mxu0 0
          %788 = vmatprep.subr.bf16.mxu0 0
          %789 = vmatpush1.bf16.msra.mxu0 0
          %790 = vmatprep.subr.bf16.mxu0 0
          %791 = vmatpush1.bf16.msra.mxu0 0
          %792 = vmatprep.subr.bf16.mxu0 0
          %793 = vmatpush1.bf16.msra.mxu0 0
          %794 = vmatprep.subr.bf16.mxu0 0
          %795 = vmatpush1.bf16.msra.mxu0 0
          %796 = vmatprep.subr.bf16.mxu0 0
          %797 = vmatpush1.bf16.msra.mxu0 0
          %798 = vmatprep.subr.bf16.mxu0 0
          %799 = vmatpush1.bf16.msra.mxu0 0
          %800 = vmatprep.subr.bf16.mxu0 0
          %801 = vmatpush1.bf16.msra.mxu0 0
          %802 = vmatprep.subr.bf16.mxu0 0
          %803 = vmatpush1.bf16.msra.mxu0 0
          %804 = vmatprep.subr.bf16.mxu0 0
          %805 = vmatpush1.bf16.msra.mxu0 0
          %806 = vmatprep.subr.bf16.mxu0 0
          %807 = vmatpush1.bf16.msra.mxu0 0
          %808 = vmatprep.subr.bf16.mxu0 0
          %809 = vmatpush1.bf16.msra.mxu0 0
          %810 = vmatprep.subr.bf16.mxu0 0
          %811 = vmatpush1.bf16.msra.mxu0 0
          %812 = vmatprep.mubr.bf16.mxu0 0
          %813 = vmatmul.mubr.bf16.gmra.mrb[0].mxu0 %v778
          %v814 = vpop.f32.mrb[0].mxu0
          %v815 = vadd.f32 0.0, %v814
          %v816 = vpop.f32.mrb[0].mxu0
          %v817 = vadd.f32 0.0, %v816
          %v818 = vpop.f32.mrb[0].mxu0
          %v819 = vpop.f32.mrb[0].mxu0
          %820 = vdwg.mxu0
          %v822 = vsel %vm776, %v775, 0
          %824 = vmatprep.subr.bf16.mxu0 %v773
          %825 = vmatpush1.bf16.msra.mxu0 %v772
          %826 = vmatprep.subr.bf16.mxu0 0
          %827 = vmatpush1.bf16.msra.mxu0 0
          %828 = vmatprep.subr.bf16.mxu0 0
          %829 = vmatpush1.bf16.msra.mxu0 0
          %830 = vmatprep.subr.bf16.mxu0 0
          %831 = vmatpush1.bf16.msra.mxu0 0
          %832 = vmatprep.subr.bf16.mxu0 0
          %833 = vmatpush1.bf16.msra.mxu0 0
          %834 = vmatprep.subr.bf16.mxu0 0
          %835 = vmatpush1.bf16.msra.mxu0 0
          %836 = vmatprep.subr.bf16.mxu0 0
          %837 = vmatpush1.bf16.msra.mxu0 0
          %838 = vmatprep.subr.bf16.mxu0 0
          %839 = vmatpush1.bf16.msra.mxu0 0
          %840 = vmatprep.subr.bf16.mxu0 0
          %841 = vmatpush1.bf16.msra.mxu0 0
          %842 = vmatprep.subr.bf16.mxu0 0
          %843 = vmatpush1.bf16.msra.mxu0 0
          %844 = vmatprep.subr.bf16.mxu0 0
          %845 = vmatpush1.bf16.msra.mxu0 0
          %846 = vmatprep.subr.bf16.mxu0 0
          %847 = vmatpush1.bf16.msra.mxu0 0
          %848 = vmatprep.subr.bf16.mxu0 0
          %849 = vmatpush1.bf16.msra.mxu0 0
          %850 = vmatprep.subr.bf16.mxu0 0
          %851 = vmatpush1.bf16.msra.mxu0 0
          %852 = vmatprep.subr.bf16.mxu0 0
          %853 = vmatpush1.bf16.msra.mxu0 0
          %854 = vmatprep.subr.bf16.mxu0 0
          %855 = vmatpush1.bf16.msra.mxu0 0
          %856 = vmatprep.mubr.bf16.mxu0 0
          %857 = vmatmul.mubr.bf16.gmra.mrb[0].mxu0 %v822
          %v858 = vpop.f32.mrb[0].mxu0
          %v859 = vadd.f32 0.0, %v858
          %v860 = vpop.f32.mrb[0].mxu0
          %v861 = vadd.f32 0.0, %v860
          %v862 = vpop.f32.mrb[0].mxu0
          %v863 = vpop.f32.mrb[0].mxu0
          %864 = vdwg.mxu0
          %v865 = vadd.f32 %v719, %v815
          %v866 = vadd.f32 %v720, %v817
          %v867 = vadd.f32 %v721, %v859
          %v868 = vadd.f32 %v722, %v861
          %v869 = vadd.f32 %v865, 1e-18
          %v870 = vadd.f32 %v866, 1e-18
          %v871 = vadd.f32 %v867, 1e-18
          %v872 = vadd.f32 %v868, 1e-18
          %v873 = vlog2.pop %v869
          %v874 = vmul.f32 %v873, 0.6931472
          %v875 = vlog2.pop %v870
          %v876 = vmul.f32 %v875, 0.6931472
          %v877 = vlog2.pop %v871
          %v878 = vmul.f32 %v877, 0.6931472
          %v879 = vlog2.pop %v872
          %v880 = vmul.f32 %v879, 0.6931472
          %881 = vst [vmem:[%s379] sm:$0xff] %v874
          %882 = vst [vmem:[%s379 + $0x8] sm:$0xff] %v876
          %883 = vst [vmem:[%s379 + $0x10] sm:$0xff] %v878
          %884 = vst [vmem:[%s379 + $0x18] sm:$0xff] %v880
        $region76: #{tpu_custom_call.1} parent=47 // pred_fallthru
          _
        %s885 = sand.u32 %s226, 1
        %s886 = scalar_lea.sflag [#allocation8], %s885
        %s887 = sand.u32 %s226, 1
        %s888 = smul.addr %s887, 32
        %s889 = scalar_lea.vmem [#allocation12], %s888
        // Predicated region
        $region77: #{tpu_custom_call.1} parent=47 // pred_check
          %p890 = pneg %p236
        $region78: #{tpu_custom_call.1} parent=47 // pred_check_branch
          %892 = sbr.rel (%p890) target = $region80
        $region79: #{tpu_custom_call.1} parent=47 // pred_region
          %s893 = smul.u32 %s30, %s29
          %s894 = smul.u32 2, %s28
          %s895 = smul.u32 2, %s893
          %s897 = ssub.s32 512, 512
          %898 = vsyncadd %s886, %s897
          %s899 = smul.addr %s894, 2
          %s900 = sadd.s32 %s895, %s899
          %s901 = smul.addr %s900, 128
          %s902 = scalar_lea.hbm %s7, %s901
          %s903 = sshll.u32 %s889, 4
          %s904 = int_to_ptr.vmem [resolvable:$true] %s903
          %909 = dma.vmem_to_hbm [thread:$0]  %s904, 512, %s902, %s886, 256, 256, 16
        $region80: #{tpu_custom_call.1} parent=47 // pred_fallthru
          _
      $region48: #{tpu_custom_call.1} parent=5 // pred_fallthru
        _
      %p910 = scmp.le.s32.totalorder 2, %s18
      // Predicated region
      $region81: #{tpu_custom_call.1} parent=5 // pred_check
        %p911 = pneg %p910
      $region82: #{tpu_custom_call.1} parent=5 // pred_check_branch
        %913 = sbr.rel (%p911) target = $region84
      $region83: #{tpu_custom_call.1} parent=5 // pred_region
        %s914 = ssub.s32 %s18, 2
        // Predicated region
        $region85: #{tpu_custom_call.1} parent=83 // pred_check
          %p915 = pneg %p242
        $region86: #{tpu_custom_call.1} parent=83 // pred_check_branch
          %917 = sbr.rel (%p915) target = $region88
        $region87: #{tpu_custom_call.1} parent=83 // pred_region
          %s918 = sand.u32 %s227, 1
          %s919 = scalar_lea.sflag [#allocation8], %s918
          %s920 = sand.u32 %s227, 1
          %s921 = smul.addr %s920, 32
          %s922 = scalar_lea.vmem [#allocation12], %s921
          %923 = dma.done %s919, 512
        $region88: #{tpu_custom_call.1} parent=83 // pred_fallthru
          _
      $region84: #{tpu_custom_call.1} parent=5 // pred_fallthru
        _
    $region6: #{tpu_custom_call.1} parent=1 // loop_footer
      %s22 = sadd.s32 1, %s18
    $region7: #{tpu_custom_call.1} parent=1 // loop_footer_branch
      %17 = sbr.rel target = $region3
    $region8: #{tpu_custom_call.1} parent=1 // loop_exit
      _
    %924 = vsyncpa [#allocation7], 1
    %s925 = scalar_lea.sflag [#allocation7], 1
    %926 = vsyncpa %s925, 1
    %927 = vsyncpa [#allocation10], 1
    %928 = vsyncpa [#allocation8], 1
    %s929 = scalar_lea.sflag [#allocation8], 1
    %930 = vsyncpa %s929, 1

</llo_original>
